<compile_context>
chip_gen: v7x
topology: tpu7x:2x2x1
jax: 0.10.0
libtpu: 0.0.40
codegen_flags: <defaults>
</compile_context>

<pallas_src>
import jax
import jax.numpy as jnp
import numpy as np
from jax.experimental import pallas as pl
from jax.experimental.pallas import tpu as pltpu

_LANE = 128
_SUBLANE = 8


def _round_up(x, m):
    return m * ((x + m - 1) // m)


# ----------------------------------------------------------------------------- kernels
def _num_tokens(x_num_ref, w_ref, b_ref, out_ref):
    """out[b, f, :] = x_num[b, f] * W[f, :] + B[f, :]  (one dense full-block store)."""
    x = x_num_ref[...]                                       # (tb, n_num)
    w = w_ref[...]                                           # (n_num, d)
    b = b_ref[...]                                           # (n_num, d)
    out_ref[...] = (x[:, :, None] * w[None, :, :] + b[None, :, :]).astype(out_ref.dtype)


def _cat_tokens(idx_ref, table_ref, out_ref):
    """out[r, :] = table[idx[r], :] via ONE fused one-hot @ table MXU matmul.

    idx_ref holds GLOBAL rows into the packed table (per-feature offsets already added)
    and the per-feature categorical bias is folded into the table rows at pack time, so
    the matmul result is the finished categorical token. Rows are batch-major
    (row = b * n_cat + f).  Out-of-range indices silently select a zero row.
    """
    idx = idx_ref[...]                                       # (tb * n_cat, 1) int32
    table = table_ref[...]                                   # (c_pad, d_mat), d_mat % 128 == 0
    m = idx.shape[0]
    c = table.shape[0]
    iota = jax.lax.broadcasted_iota(jnp.int32, (m, c), 1)
    onehot = (idx == iota).astype(table.dtype)               # (m, c_pad)
    rows = jnp.dot(onehot, table, preferred_element_type=jnp.float32)   # (m, d_mat)
    d = out_ref.shape[-1]
    out_ref[...] = rows[:, :d].astype(out_ref.dtype)         # one dense full-block store


def _fused_kernel(x_num_ref, w_ref, b_ref, idx_ref, table_ref, num_out_ref, cat_out_ref):
    _num_tokens(x_num_ref, w_ref, b_ref, num_out_ref)
    _cat_tokens(idx_ref, table_ref, cat_out_ref)


def _num_only_kernel(x_num_ref, w_ref, b_ref, out_ref):
    _num_tokens(x_num_ref, w_ref, b_ref, out_ref)


def _cat_only_kernel(idx_ref, table_ref, out_ref):
    _cat_tokens(idx_ref, table_ref, out_ref)


# --------------------------------------------------------------- one-time parameter packing
def pack_tabular_embedding_params(w_num=None, b_num=None, cat_tables=None, b_cat=None,
                                  dtype=jnp.float32):
    """One-time packing of module parameters (hoisted out of the per-call hot path)."""
    params = {"n_num": 0, "n_cat": 0, "d_token": None}
    if w_num is not None:
        w_num = jnp.asarray(w_num, dtype)
        b_num = jnp.asarray(b_num, dtype)
        params["w_num"] = w_num
        params["b_num"] = b_num
        params["n_num"] = int(w_num.shape[0])
        params["d_token"] = int(w_num.shape[1])
    if cat_tables:
        b_cat = jnp.asarray(b_cat, dtype)
        cards = [int(t.shape[0]) for t in cat_tables]
        d = int(cat_tables[0].shape[1])
        if params["d_token"] is None:
            params["d_token"] = d
        assert params["d_token"] == d, "d_token mismatch between numerical / categorical parts"
        # Fold the per-feature categorical bias into the packed table rows so the
        # in-kernel one-hot matmul directly produces the finished token.
        biased = [jnp.asarray(t, dtype) + b_cat[f][None, :] for f, t in enumerate(cat_tables)]
        packed = jnp.concatenate(biased, axis=0)                     # (sum_card, d)
        sum_card = int(packed.shape[0])
        c_pad = _round_up(max(sum_card, _SUBLANE), _SUBLANE)
        d_mat = _round_up(d, _LANE)                                  # MXU-friendly RHS lanes
        params["table"] = jnp.pad(packed, ((0, c_pad - sum_card), (0, d_mat - d)))
        offsets = np.zeros(len(cards), dtype=np.int32)
        offsets[1:] = np.cumsum(cards[:-1])
        params["offsets"] = jnp.asarray(offsets)
        params["n_cat"] = len(cards)
        params["cardinalities"] = cards
    assert params["n_num"] or params["n_cat"], "need numerical and/or categorical features"
    return params


# ----------------------------------------------------------------- tile / VMEM heuristics
def _vmem_budget_bytes():
    cap = 64 * 1024 * 1024                        # conservative default (v7x-sized)
    try:
        cap = int(getattr(pltpu.get_tpu_info(), "vmem_capacity_bytes", cap)) or cap
    except Exception:
        pass
    # ~48 MiB budget on 64-MiB parts (v7x), ~96 MiB on 128-MiB parts (v5e/v6e).
    return max(32 * 1024 * 1024, min(96 * 1024 * 1024, (cap * 3) // 4))


def _estimate_vmem_bytes(tb, n_num, n_cat, c_pad, d_token):
    """Rough per-step VMEM footprint: double-buffered blocks + in-flight temporaries."""
    d_l = _round_up(max(d_token, 1), _LANE)
    total = 0
    if n_num:
        n_su = _round_up(n_num, _SUBLANE)
        total += 2 * tb * _round_up(n_num, _LANE) * 4            # x_num input blocks
        total += 2 * tb * n_su * d_l * 4                         # num_out blocks
        total += 2 * 2 * n_su * d_l * 4                          # w_num + b_num blocks
        total += tb * n_su * d_l * 4                             # broadcast temporary
    if n_cat:
        c_l = _round_up(max(c_pad, 1), _LANE)
        total += 2 * tb * n_cat * _LANE * 4                      # flattened index blocks
        total += 2 * tb * n_cat * d_l * 4                        # cat_out blocks
        total += 2 * c_pad * d_l * 4                             # packed table blocks
        total += tb * n_cat * (c_l + d_l) * 4                    # one-hot + matmul temporaries
    return total


def _pick_batch_tile(B, n_num, n_cat, c_pad, d_token, vmem_budget, requested=None):
    if requested is not None:
        tb = max(_SUBLANE, _round_up(int(requested), _SUBLANE))
        return min(tb, _round_up(max(B, 1), _SUBLANE))
    T = max(1, n_num + n_cat)
    # Target ~16 MiB of real output bytes per grid step (kernel is HBM-writeback bound),
    # capped at 4096 rows, then shrink until the VMEM estimate fits the budget.
    rows = (16 * 1024 * 1024) // max(1, T * d_token * 4)
    tb = max(_SUBLANE, min(4096, (rows // _SUBLANE) * _SUBLANE))
    tb = min(tb, _round_up(max(B, 1), _SUBLANE))
    while tb > _SUBLANE and _estimate_vmem_bytes(tb, n_num, n_cat, c_pad, d_token) > (vmem_budget * 4) // 5:
        tb = max(_SUBLANE, _round_up(tb // 2, _SUBLANE))
    # Prefer >= 2 grid steps so dimension_semantics=("parallel",) can shard across both
    # TensorCores on multi-TC chips (v7x) -- only when tiles stay reasonably large.
    if tb >= B and B >= 1024:
        tb = max(_SUBLANE, _round_up((B + 1) // 2, _SUBLANE))
    return tb


# -------------------------------------------------------------------------- forward pass
def tabular_ordinal_embedding(params, x_num=None, x_cat=None, *,
                              batch_tile=None, out_dtype=jnp.float32):
    """Forward pass; returns (B, n_num + n_cat, d_token) tokens (matches the torch module)."""
    n_num, n_cat, d = params["n_num"], params["n_cat"], params["d_token"]
    assert (x_num is not None) == (n_num > 0), "x_num must match the packed numerical params"
    assert (x_cat is not None) == (n_cat > 0), "x_cat must match the packed categorical params"
    B = int((x_num if x_num is not None else x_cat).shape[0])

    c_pad = int(params["table"].shape[0]) if n_cat else 0
    budget = _vmem_budget_bytes()
    tb = _pick_batch_tile(B, n_num, n_cat, c_pad, d, budget, batch_tile)
    b_pad = _round_up(B, tb)
    grid = (b_pad // tb,)

    inputs, in_specs, out_shape, out_specs = [], [], [], []
    if n_num:
        x_num_p = jnp.pad(jnp.asarray(x_num, params["w_num"].dtype), ((0, b_pad - B), (0, 0)))
        inputs += [x_num_p, params["w_num"], params["b_num"]]
        in_specs += [
            pl.BlockSpec((tb, n_num), lambda i: (i, 0)),
            pl.BlockSpec((n_num, d), lambda i: (0, 0)),
            pl.BlockSpec((n_num, d), lambda i: (0, 0)),
        ]
        out_shape.append(jax.ShapeDtypeStruct((b_pad, n_num, d), out_dtype))
        out_specs.append(pl.BlockSpec((tb, n_num, d), lambda i: (i, 0, 0)))
    if n_cat:
        # Global packed-table rows; padded batch rows point at row 0 (valid, sliced off).
        idx = jnp.asarray(x_cat, jnp.int32) + params["offsets"][None, :]
        idx = jnp.pad(idx, ((0, b_pad - B), (0, 0)))
        idx_flat = idx.reshape(b_pad * n_cat, 1)                  # batch-major: row = b*n_cat + f
        d_mat = int(params["table"].shape[1])
        inputs += [idx_flat, params["table"]]
        in_specs += [
            pl.BlockSpec((tb * n_cat, 1), lambda i: (i, 0)),
            pl.BlockSpec((c_pad, d_mat), lambda i: (0, 0)),
        ]
        out_shape.append(jax.ShapeDtypeStruct((b_pad * n_cat, d), out_dtype))
        out_specs.append(pl.BlockSpec((tb * n_cat, d), lambda i: (i, 0)))

    if n_num and n_cat:
        kernel = _fused_kernel
    elif n_num:
        kernel = _num_only_kernel
    else:
        kernel = _cat_only_kernel

    outs = pl.pallas_call(
        kernel,
        out_shape=tuple(out_shape),
        grid=grid,
        in_specs=in_specs,
        out_specs=tuple(out_specs),
        compiler_params=pltpu.CompilerParams(
            dimension_semantics=("parallel",),
            vmem_limit_bytes=budget,
        ),
    )(*inputs)
    if not isinstance(outs, (tuple, list)):
        outs = (outs,)

    parts, k = [], 0
    if n_num:
        parts.append(outs[k][:B])
        k += 1
    if n_cat:
        parts.append(outs[k].reshape(b_pad, n_cat, d)[:B])
        k += 1
    return parts[0] if len(parts) == 1 else jnp.concatenate(parts, axis=1)


# ------------------------------------------------------------------------------ reference
def _reference(x_num, x_cat, w_num, b_num, cat_tables, b_cat):
    parts = []
    if x_num is not None:
        parts.append(x_num[:, :, None] * w_num[None, :, :] + b_num[None, :, :])
    if x_cat is not None:
        toks = [cat_tables[f][x_cat[:, f]] + b_cat[f][None, :] for f in range(len(cat_tables))]
        parts.append(jnp.stack(toks, axis=1))
    return parts[0] if len(parts) == 1 else jnp.concatenate(parts, axis=1)


def _make_params(key, n_num, cards, d):
    ks = jax.random.split(key, 3 + max(1, len(cards)))
    inv = 1.0 / np.sqrt(d)
    w_num = jax.random.uniform(ks[0], (n_num, d), jnp.float32, -inv, inv) if n_num else None
    b_num = jax.random.uniform(ks[1], (n_num, d), jnp.float32, -inv, inv) if n_num else None
    b_cat = jax.random.uniform(ks[2], (len(cards), d), jnp.float32, -inv, inv) if cards else None
    tables = [jax.random.uniform(ks[3 + i], (c, d), jnp.float32, -inv, inv)
              for i, c in enumerate(cards)]
    return w_num, b_num, tables, b_cat


if __name__ == "__main__":
    key = jax.random.PRNGKey(0)

    # 1) docstring-sized config: 3 numerical + [2, 3] categorical features, d_token = 7.
    k_p, k_x, key = jax.random.split(key, 3)
    n_objects, n_num, cards, d = 4, 3, [2, 3], 7
    w_num, b_num, tables, b_cat = _make_params(k_p, n_num, cards, d)
    x_num = jax.random.normal(k_x, (n_objects, n_num), jnp.float32)
    x_cat = jnp.array([[0, 1], [1, 0], [0, 2], [1, 1]], jnp.int32)

    params = pack_tabular_embedding_params(w_num, b_num, tables, b_cat)
    out = jax.block_until_ready(tabular_ordinal_embedding(params, x_num, x_cat))
    ref = _reference(x_num, x_cat, w_num, b_num, tables, b_cat)
    assert out.shape == (n_objects, n_num + len(cards), d)
    assert jnp.allclose(out, ref, atol=1e-5, rtol=1e-5), "fused kernel mismatch"

    # 2) larger config exercising a multi-step grid + batch padding (B % tile != 0).
    k_p, k_x, k_c, key = jax.random.split(key, 4)
    n_objects, n_num, cards, d = 300, 5, [7, 3, 11], 32
    w_num, b_num, tables, b_cat = _make_params(k_p, n_num, cards, d)
    x_num = jax.random.normal(k_x, (n_objects, n_num), jnp.float32)
    maxc = jnp.asarray(cards, jnp.int32)[None, :]
    x_cat = (jax.random.randint(k_c, (n_objects, len(cards)), 0, 10_000) % maxc).astype(jnp.int32)

    params = pack_tabular_embedding_params(w_num, b_num, tables, b_cat)
    out = jax.block_until_ready(
        tabular_ordinal_embedding(params, x_num, x_cat, batch_tile=128))
    ref = _reference(x_num, x_cat, w_num, b_num, tables, b_cat)
    assert out.shape == (n_objects, n_num + len(cards), d)
    assert jnp.allclose(out, ref, atol=1e-5, rtol=1e-5), "multi-tile kernel mismatch"

    # 3) numerical-only and categorical-only module configurations.
    params_num = pack_tabular_embedding_params(w_num, b_num, None, None)
    out_n = jax.block_until_ready(tabular_ordinal_embedding(params_num, x_num, None))
    assert jnp.allclose(out_n, _reference(x_num, None, w_num, b_num, None, None),
                        atol=1e-5, rtol=1e-5), "numerical-only mismatch"

    params_cat = pack_tabular_embedding_params(None, None, tables, b_cat)
    out_c = jax.block_until_ready(tabular_ordinal_embedding(params_cat, None, x_cat))
    assert jnp.allclose(out_c, _reference(None, x_cat, None, None, tables, b_cat),
                        atol=1e-5, rtol=1e-5), "categorical-only mismatch"

    print("KERNEL_OK")
</pallas_src>

<mosaic_0001>
module attributes {stable_mosaic.version = 11 : i64} {
  func.func @_fused_kernel(%arg0: i32, %arg1: memref<8x3xf32, #tpu.memory_space<vmem>>, %arg2: memref<3x7xf32, #tpu.memory_space<vmem>>, %arg3: memref<3x7xf32, #tpu.memory_space<vmem>>, %arg4: memref<16x1xi32, #tpu.memory_space<vmem>>, %arg5: memref<8x128xf32, #tpu.memory_space<vmem>>, %arg6: memref<8x3x7xf32, #tpu.memory_space<vmem>>, %arg7: memref<16x7xf32, #tpu.memory_space<vmem>>) attributes {dimension_semantics = [#tpu.dimension_semantics<parallel>], iteration_bounds = array<i64: 1>, scalar_prefetch = 0 : i64, scratch_operands = 0 : i64, tpu.core_type = #tpu.core_type<tc>, window_params = [{transform_indices = @transform_0, window_bounds = array<i64: 8, 3>}, {pipeline_mode = #tpu.pipeline_mode<synchronous>, transform_indices = @transform_1, window_bounds = array<i64: 3, 7>}, {pipeline_mode = #tpu.pipeline_mode<synchronous>, transform_indices = @transform_2, window_bounds = array<i64: 3, 7>}, {transform_indices = @transform_3, window_bounds = array<i64: 16, 1>}, {pipeline_mode = #tpu.pipeline_mode<synchronous>, transform_indices = @transform_4, window_bounds = array<i64: 8, 128>}, {transform_indices = @transform_5, window_bounds = array<i64: 8, 3, 7>}, {transform_indices = @transform_6, window_bounds = array<i64: 16, 7>}]} {
    %c0 = arith.constant 0 : index
    %c0_0 = arith.constant 0 : index
    %0 = vector.load %arg1[%c0, %c0_0] : memref<8x3xf32, #tpu.memory_space<vmem>>, vector<8x3xf32>
    %c0_1 = arith.constant 0 : index
    %c0_2 = arith.constant 0 : index
    %1 = vector.load %arg2[%c0_1, %c0_2] : memref<3x7xf32, #tpu.memory_space<vmem>>, vector<3x7xf32>
    %c0_3 = arith.constant 0 : index
    %c0_4 = arith.constant 0 : index
    %2 = vector.load %arg3[%c0_3, %c0_4] : memref<3x7xf32, #tpu.memory_space<vmem>>, vector<3x7xf32>
    %3 = vector.shape_cast %0 : vector<8x3xf32> to vector<8x3x1xf32>
    %4 = vector.shape_cast %1 : vector<3x7xf32> to vector<1x3x7xf32>
    %5 = vector.broadcast %3 : vector<8x3x1xf32> to vector<8x3x7xf32>
    %6 = vector.broadcast %4 : vector<1x3x7xf32> to vector<8x3x7xf32>
    %7 = arith.mulf %5, %6 : vector<8x3x7xf32>
    %8 = vector.shape_cast %2 : vector<3x7xf32> to vector<1x3x7xf32>
    %9 = vector.broadcast %8 : vector<1x3x7xf32> to vector<8x3x7xf32>
    %10 = arith.addf %7, %9 : vector<8x3x7xf32>
    %c0_5 = arith.constant 0 : index
    %c0_6 = arith.constant 0 : index
    %c0_7 = arith.constant 0 : index
    %11 = vector.load %arg6[%c0_5, %c0_6, %c0_7] : memref<8x3x7xf32, #tpu.memory_space<vmem>>, vector<8x3x7xf32>
    tpu.vector_store %arg6[%c0_5, %c0_6, %c0_7], %10 {strides = array<i32>} : memref<8x3x7xf32, #tpu.memory_space<vmem>>, vector<8x3x7xf32>,
    %c0_8 = arith.constant 0 : index
    %c0_9 = arith.constant 0 : index
    %12 = vector.load %arg4[%c0_8, %c0_9] : memref<16x1xi32, #tpu.memory_space<vmem>>, vector<16x1xi32>
    %c0_10 = arith.constant 0 : index
    %c0_11 = arith.constant 0 : index
    %13 = vector.load %arg5[%c0_10, %c0_11] : memref<8x128xf32, #tpu.memory_space<vmem>>, vector<8x128xf32>
    %14 = tpu.iota {dimensions = array<i32: 1>} : vector<16x8xi32>
    %15 = vector.broadcast %12 : vector<16x1xi32> to vector<16x8xi32>
    %16 = arith.cmpi eq, %15, %14 : vector<16x8xi32>
    %17 = arith.extui %16 : vector<16x8xi1> to vector<16x8xi32>
    %18 = arith.sitofp %17 : vector<16x8xi32> to vector<16x8xf32>
    %cst = arith.constant dense<0.000000e+00> : vector<16x128xf32>
    %19 = tpu.matmul %18, %13, %cst {dimension_numbers = #tpu.dot_dimension_numbers<[1], [0], [0], [1], [0, 0, 1, 1], [], []>} : vector<16x8xf32>, vector<8x128xf32>, vector<16x128xf32> -> vector<16x128xf32>
    %20 = vector.extract_strided_slice %19 {offsets = [0, 0], sizes = [16, 7], strides = [1, 1]} : vector<16x128xf32> to vector<16x7xf32>
    %c0_12 = arith.constant 0 : index
    %c0_13 = arith.constant 0 : index
    %21 = vector.load %arg7[%c0_12, %c0_13] : memref<16x7xf32, #tpu.memory_space<vmem>>, vector<16x7xf32>
    tpu.vector_store %arg7[%c0_12, %c0_13], %20 {strides = array<i32>} : memref<16x7xf32, #tpu.memory_space<vmem>>, vector<16x7xf32>,
    return
  }
  func.func @transform_0(%arg0: i32) -> (i32, i32) {
    %c0_i32 = arith.constant 0 : i32
    %c0_i32_0 = arith.constant 0 : i32
    return %arg0, %c0_i32 : i32, i32
  }
  func.func @transform_1(%arg0: i32) -> (i32, i32) {
    %c0_i32 = arith.constant 0 : i32
    %c0_i32_0 = arith.constant 0 : i32
    %c0_i32_1 = arith.constant 0 : i32
    return %c0_i32, %c0_i32_0 : i32, i32
  }
  func.func @transform_2(%arg0: i32) -> (i32, i32) {
    %c0_i32 = arith.constant 0 : i32
    %c0_i32_0 = arith.constant 0 : i32
    %c0_i32_1 = arith.constant 0 : i32
    return %c0_i32, %c0_i32_0 : i32, i32
  }
  func.func @transform_3(%arg0: i32) -> (i32, i32) {
    %c0_i32 = arith.constant 0 : i32
    %c0_i32_0 = arith.constant 0 : i32
    return %arg0, %c0_i32 : i32, i32
  }
  func.func @transform_4(%arg0: i32) -> (i32, i32) {
    %c0_i32 = arith.constant 0 : i32
    %c0_i32_0 = arith.constant 0 : i32
    %c0_i32_1 = arith.constant 0 : i32
    return %c0_i32, %c0_i32_0 : i32, i32
  }
  func.func @transform_5(%arg0: i32) -> (i32, i32, i32) {
    %c0_i32 = arith.constant 0 : i32
    %c0_i32_0 = arith.constant 0 : i32
    %c0_i32_1 = arith.constant 0 : i32
    return %arg0, %c0_i32, %c0_i32_0 : i32, i32, i32
  }
  func.func @transform_6(%arg0: i32) -> (i32, i32) {
    %c0_i32 = arith.constant 0 : i32
    %c0_i32_0 = arith.constant 0 : i32
    return %arg0, %c0_i32 : i32, i32
  }
}

</mosaic_0001>

<llo_original>
// kernel: tpu_custom_call.1
$region0: #{tpu_custom_call.1}
  #allocation0 [shape = 'u32[]', space=smem, size = 0x4, offset = 0x4, fixed_abs, tag = 'smem constant byte address 0x4 - core index']
  #allocation1 [shape = 'u32[144,128]{1,0:T(1,128)}', space=vmem, size = 0x12000, scoped, tag = 'internal scratch']
  %s0 = inlined_call_operand.vmem [shape: f32[8,3], index: 0, kind: input, shape index: {}]
  %s1 = inlined_call_operand.vmem [shape: f32[3,7], index: 1, kind: input, shape index: {}]
  %s2 = inlined_call_operand.vmem [shape: f32[3,7], index: 2, kind: input, shape index: {}]
  %s3 = inlined_call_operand.vmem [shape: s32[16,1], index: 3, kind: input, shape index: {}]
  %s4 = inlined_call_operand.vmem [shape: f32[8,128], index: 4, kind: input, shape index: {}]
  %s5 = inlined_call_operand.vmem [shape: f32[8,3,7], index: 5, kind: output, shape index: {0}]
  %s6 = inlined_call_operand.vmem [shape: f32[16,7], index: 6, kind: output, shape index: {1}]
  %7 = xla_tuple %s5, %s6
  %s8 = sld [smem:[#allocation0]]
  $region38: #{tpu_custom_call.1} parent=0
    _
  %s10 = ssub.s32 1, %s8
  %s11 = scalar_select 0, %s10, %s8
  // Predicated region
  $region2: #{tpu_custom_call.1} parent=0 // pred_check
    _
  $region3: #{tpu_custom_call.1} parent=0 // pred_check_branch
    %13 = sbr.rel (0) target = $region5
  $region4: #{tpu_custom_call.1} parent=0 // pred_region
    _
  $region5: #{tpu_custom_call.1} parent=0 // pred_fallthru
    _
  // Predicated region
  $region6: #{tpu_custom_call.1} parent=0 // pred_check
    _
  $region7: #{tpu_custom_call.1} parent=0 // pred_check_branch
    %15 = sbr.rel (0) target = $region9
  $region8: #{tpu_custom_call.1} parent=0 // pred_region
    _
  $region9: #{tpu_custom_call.1} parent=0 // pred_fallthru
    _
  // Predicated region
  $region10: #{tpu_custom_call.1} parent=0 // pred_check
    _
  $region11: #{tpu_custom_call.1} parent=0 // pred_check_branch
    %17 = sbr.rel (0) target = $region13
  $region12: #{tpu_custom_call.1} parent=0 // pred_region
    _
  $region13: #{tpu_custom_call.1} parent=0 // pred_fallthru
    _
  // Predicated region
  $region14: #{tpu_custom_call.1} parent=0 // pred_check
    _
  $region15: #{tpu_custom_call.1} parent=0 // pred_check_branch
    %19 = sbr.rel (0) target = $region17
  $region16: #{tpu_custom_call.1} parent=0 // pred_region
    _
  $region17: #{tpu_custom_call.1} parent=0 // pred_fallthru
    _
  // Predicated region
  $region18: #{tpu_custom_call.1} parent=0 // pred_check
    _
  $region19: #{tpu_custom_call.1} parent=0 // pred_check_branch
    %21 = sbr.rel (0) target = $region21
  $region20: #{tpu_custom_call.1} parent=0 // pred_region
    _
  $region21: #{tpu_custom_call.1} parent=0 // pred_fallthru
    _
  %v22 = vld [vmem:[%s0] sm:$0xff]
  %v23 = vld [vmem:[%s1] sm:$0x7]
  %v24 = vld [vmem:[%s2] sm:$0x7]
  %v25 = vlaneseq
  %v26 = vshrl.u32 %v25, 7
  %v27 = vsub.s32 0, %v26
  %v28 = vrot.slane %v22, %v27
  %30 = vbcast.lane.b32.xlu0 %v28, 256
  %v31 = vpop.permute.xlu0 %30
  %v32 = vlaneseq
  %v33 = vshrl.u32 %v32, 7
  %v34 = vsub.s32 1, %v33
  %v35 = vrot.slane %v22, %v34
  %37 = vbcast.lane.b32.xlu0 %v35, 256
  %v38 = vpop.permute.xlu0 %37
  %v39 = vlaneseq
  %v40 = vshrl.u32 %v39, 7
  %v41 = vsub.s32 2, %v40
  %v42 = vrot.slane %v22, %v41
  %44 = vbcast.lane.b32.xlu0 %v42, 256
  %v45 = vpop.permute.xlu0 %44
  %v46 = vlaneseq
  %v47 = vshrl.u32 %v46, 7
  %v48 = vsub.s32 3, %v47
  %v49 = vrot.slane %v22, %v48
  %51 = vbcast.lane.b32.xlu0 %v49, 256
  %v52 = vpop.permute.xlu0 %51
  %v53 = vlaneseq
  %v54 = vshrl.u32 %v53, 7
  %v55 = vsub.s32 4, %v54
  %v56 = vrot.slane %v22, %v55
  %58 = vbcast.lane.b32.xlu0 %v56, 256
  %v59 = vpop.permute.xlu0 %58
  %v60 = vlaneseq
  %v61 = vshrl.u32 %v60, 7
  %v62 = vsub.s32 5, %v61
  %v63 = vrot.slane %v22, %v62
  %65 = vbcast.lane.b32.xlu0 %v63, 256
  %v66 = vpop.permute.xlu0 %65
  %v67 = vlaneseq
  %v68 = vshrl.u32 %v67, 7
  %v69 = vsub.s32 6, %v68
  %v70 = vrot.slane %v22, %v69
  %72 = vbcast.lane.b32.xlu0 %v70, 256
  %v73 = vpop.permute.xlu0 %72
  %v74 = vlaneseq
  %v75 = vshrl.u32 %v74, 7
  %v76 = vsub.s32 7, %v75
  %v77 = vrot.slane %v22, %v76
  %79 = vbcast.lane.b32.xlu0 %v77, 256
  %v80 = vpop.permute.xlu0 %79
  %v81 = vmul.f32 %v31, %v23
  %v82 = vmul.f32 %v38, %v23
  %v83 = vmul.f32 %v45, %v23
  %v84 = vmul.f32 %v52, %v23
  %v85 = vmul.f32 %v59, %v23
  %v86 = vmul.f32 %v66, %v23
  %v87 = vmul.f32 %v73, %v23
  %v88 = vmul.f32 %v80, %v23
  %v89 = vadd.f32 %v81, %v24
  %v90 = vadd.f32 %v82, %v24
  %v91 = vadd.f32 %v83, %v24
  %v92 = vadd.f32 %v84, %v24
  %v93 = vadd.f32 %v85, %v24
  %v94 = vadd.f32 %v86, %v24
  %v95 = vadd.f32 %v87, %v24
  %v96 = vadd.f32 %v88, %v24
  %vm97 = vcmask 51200
  %98 = vst.msk [vmem:[%s5] sm:$0x7] %vm97, %v89
  %99 = vst.msk [vmem:[%s5 + $0x4] sm:$0x7] %vm97, %v90
  %100 = vst.msk [vmem:[%s5 + $0x8] sm:$0x7] %vm97, %v91
  %101 = vst.msk [vmem:[%s5 + $0xc] sm:$0x7] %vm97, %v92
  %102 = vst.msk [vmem:[%s5 + $0x10] sm:$0x7] %vm97, %v93
  %103 = vst.msk [vmem:[%s5 + $0x14] sm:$0x7] %vm97, %v94
  %104 = vst.msk [vmem:[%s5 + $0x18] sm:$0x7] %vm97, %v95
  %105 = vst.msk [vmem:[%s5 + $0x1c] sm:$0x7] %vm97, %v96
  %v106 = vld [vmem:[%s3] sm:$0xff]
  %v107 = vld [vmem:[%s3 + $0x8] sm:$0xff]
  %v108 = vld [vmem:[%s4] sm:$0xff]
  %v109 = vlaneseq
  %v110 = vand.u32 %v109, 127
  %111 = vset.pattern.permute.xlu0 0
  %112 = vperm.xlu0 %111, %v106
  %v113 = vpop.permute.xlu0 %112
  %114 = vset.pattern.permute.xlu0 0
  %115 = vperm.xlu0 %114, %v107
  %v116 = vpop.permute.xlu0 %115
  %vm117 = vcmp.eq.s32.totalorder %v113, %v110
  %vm118 = vcmp.eq.s32.totalorder %v116, %v110
  %v119 = vsel %vm117, 1, 0
  %v120 = vsel %vm118, 1, 0
  %v121 = vcvt.s32.f32 %v119
  %v122 = vcvt.s32.f32 %v120
  %vm123 = vcmask 64512
  %v125 = vsel %vm123, %v121, 0
  %v128 = vsel %vm123, %v122, 0
  %130 = vmatprep.subr.mxu0 0.0
  %131 = vmatpush1.msra.mxu0 %v108
  %132 = vmatprep.subr.mxu0 0.0
  %133 = vmatpush1.msra.mxu0 0.0
  %134 = vmatprep.subr.mxu0 0.0
  %135 = vmatpush1.msra.mxu0 0.0
  %136 = vmatprep.subr.mxu0 0.0
  %137 = vmatpush1.msra.mxu0 0.0
  %138 = vmatprep.subr.mxu0 0.0
  %139 = vmatpush1.msra.mxu0 0.0
  %140 = vmatprep.subr.mxu0 0.0
  %141 = vmatpush1.msra.mxu0 0.0
  %142 = vmatprep.subr.mxu0 0.0
  %143 = vmatpush1.msra.mxu0 0.0
  %144 = vmatprep.subr.mxu0 0.0
  %145 = vmatpush1.msra.mxu0 0.0
  %146 = vmatprep.subr.mxu0 0.0
  %147 = vmatpush1.msra.mxu0 0.0
  %148 = vmatprep.subr.mxu0 0.0
  %149 = vmatpush1.msra.mxu0 0.0
  %150 = vmatprep.subr.mxu0 0.0
  %151 = vmatpush1.msra.mxu0 0.0
  %152 = vmatprep.subr.mxu0 0.0
  %153 = vmatpush1.msra.mxu0 0.0
  %154 = vmatprep.subr.mxu0 0.0
  %155 = vmatpush1.msra.mxu0 0.0
  %156 = vmatprep.subr.mxu0 0.0
  %157 = vmatpush1.msra.mxu0 0.0
  %158 = vmatprep.subr.mxu0 0.0
  %159 = vmatpush1.msra.mxu0 0.0
  %160 = vmatprep.subr.mxu0 0.0
  %161 = vmatpush1.msra.mxu0 0.0
  %162 = vmatprep.subr.mxu0 0.0
  %163 = vmatpush1.msra.mxu0 0.0
  %164 = vmatprep.subr.mxu0 0.0
  %165 = vmatpush1.msra.mxu0 0.0
  %166 = vmatprep.subr.mxu0 0.0
  %167 = vmatpush1.msra.mxu0 0.0
  %168 = vmatprep.subr.mxu0 0.0
  %169 = vmatpush1.msra.mxu0 0.0
  %170 = vmatprep.subr.mxu0 0.0
  %171 = vmatpush1.msra.mxu0 0.0
  %172 = vmatprep.subr.mxu0 0.0
  %173 = vmatpush1.msra.mxu0 0.0
  %174 = vmatprep.subr.mxu0 0.0
  %175 = vmatpush1.msra.mxu0 0.0
  %176 = vmatprep.subr.mxu0 0.0
  %177 = vmatpush1.msra.mxu0 0.0
  %178 = vmatprep.subr.mxu0 0.0
  %179 = vmatpush1.msra.mxu0 0.0
  %180 = vmatprep.subr.mxu0 0.0
  %181 = vmatpush1.msra.mxu0 0.0
  %182 = vmatprep.subr.mxu0 0.0
  %183 = vmatpush1.msra.mxu0 0.0
  %184 = vmatprep.subr.mxu0 0.0
  %185 = vmatpush1.msra.mxu0 0.0
  %186 = vmatprep.subr.mxu0 0.0
  %187 = vmatpush1.msra.mxu0 0.0
  %188 = vmatprep.subr.mxu0 0.0
  %189 = vmatpush1.msra.mxu0 0.0
  %190 = vmatprep.subr.mxu0 0.0
  %191 = vmatpush1.msra.mxu0 0.0
  %192 = vmatprep.subr.mxu0 0.0
  %193 = vmatpush1.msra.mxu0 0.0
  %194 = vmatprep.mubr.f32.mxu0 0.0
  %195 = vmatmul.mubr.f32.gmra.mrb[0].mxu0 %v125
  %v196 = vpop.f32.mrb[0].mxu0
  %v197 = vadd.f32 0.0, %v196
  %v198 = vpop.f32.mrb[0].mxu0
  %199 = vmatprep.mubr.f32.mxu0 0.0
  %200 = vmatmul.mubr.f32.gmra.mrb[0].mxu0 %v128
  %v201 = vpop.f32.mrb[0].mxu0
  %v202 = vadd.f32 0.0, %v201
  %v203 = vpop.f32.mrb[0].mxu0
  %204 = vdwg.mxu0
  %vm205 = vcmask 56320
  %206 = vst.msk [vmem:[%s6] sm:$0xff] %vm205, %v197
  %207 = vst.msk [vmem:[%s6 + $0x8] sm:$0xff] %vm205, %v202
  // Predicated region
  $region22: #{tpu_custom_call.1} parent=0 // pred_check
    _
  $region23: #{tpu_custom_call.1} parent=0 // pred_check_branch
    %209 = sbr.rel (0) target = $region25
  $region24: #{tpu_custom_call.1} parent=0 // pred_region
    _
  $region25: #{tpu_custom_call.1} parent=0 // pred_fallthru
    _
  // Predicated region
  $region26: #{tpu_custom_call.1} parent=0 // pred_check
    _
  $region27: #{tpu_custom_call.1} parent=0 // pred_check_branch
    %211 = sbr.rel (0) target = $region29
  $region28: #{tpu_custom_call.1} parent=0 // pred_region
    _
  $region29: #{tpu_custom_call.1} parent=0 // pred_fallthru
    _
  // Predicated region
  $region30: #{tpu_custom_call.1} parent=0 // pred_check
    _
  $region31: #{tpu_custom_call.1} parent=0 // pred_check_branch
    %213 = sbr.rel (0) target = $region33
  $region32: #{tpu_custom_call.1} parent=0 // pred_region
    _
  $region33: #{tpu_custom_call.1} parent=0 // pred_fallthru
    _
  // Predicated region
  $region34: #{tpu_custom_call.1} parent=0 // pred_check
    _
  $region35: #{tpu_custom_call.1} parent=0 // pred_check_branch
    %215 = sbr.rel (0) target = $region37
  $region36: #{tpu_custom_call.1} parent=0 // pred_region
    _
  $region37: #{tpu_custom_call.1} parent=0 // pred_fallthru
    _

</llo_original>
